<compile_context>
chip_gen: v6e
topology: v6e:2x2x1
jax: 0.10.0
libtpu: 0.0.40
codegen_flags: <defaults>
</compile_context>

<pallas_src>
import jax
import jax.numpy as jnp
from jax.experimental import pallas as pl
from jax.experimental.pallas import tpu as pltpu

# Max batch-tile (lane) width per grid step. 128K cols * 10 rows * 4 B ~= 5.2 MB of real x
# data per step; VMEM footprint with (8,128) sublane padding:
#   x: 2 * 16*tb*4  +  out: 2 * 8*tb*4  ~= 24 MiB  (< 48 MiB scoped limit requested below).
_MAX_TB = 128 * 1024


def mlp_kernel(x_ref, w1_ref, b1_ref, w2_ref, b2_ref, o_ref):
    # x_ref:  (10, TB)   w1_ref: (5, 10)   b1_ref: (5, 1)
    # w2_ref: (5, 1)     b2_ref: (1,) in SMEM          o_ref: (1, TB)
    h = jnp.dot(w1_ref[...], x_ref[...], preferred_element_type=jnp.float32)  # (5, TB) MXU
    h = jnp.maximum(h + b1_ref[...], 0.0)                                     # ReLU on VPU
    # fc2 (N=1): VPU multiply + sublane (XLU) reduce; kernel is HBM-bound so this is free.
    y = jnp.sum(h * w2_ref[...], axis=0, keepdims=True) + b2_ref[0]           # (1, TB)
    o_ref[...] = y.astype(o_ref.dtype)


@jax.jit
def simple_nn_forward(x, w1, b1, w2, b2):
    """x: (B, 10) f32; w1: (5, 10); b1: (5,); w2: (1, 5); b2: (1,). Returns (B, 1)."""
    B = x.shape[0]
    dtype = x.dtype

    # Adaptive lane tile: single grid step for small B, capped at _MAX_TB for large B.
    # The ragged last block reads undefined tail columns, but their output lanes are
    # masked on store, so no explicit padding pass is required.
    tb = min(_MAX_TB, ((B + 127) // 128) * 128)
    num_blocks = pl.cdiv(B, tb)

    # Lane-dense transposed layout: batch on lanes (last dim), features on sublanes.
    # allow_input_fusion below lets XLA fold this transpose into the kernel's operand
    # instead of materializing an extra HBM copy of x.
    x_t = x.T                                   # (10, B)

    b1_col = b1.reshape(-1, 1)                  # (5, 1) broadcast over lanes
    w2_col = w2.reshape(-1, 1)                  # (5, 1) for VPU mul + sublane reduce
    b2_s = b2.reshape(-1)                       # (1,) scalar, lives in SMEM

    out_t = pl.pallas_call(
        mlp_kernel,
        out_shape=jax.ShapeDtypeStruct((1, B), dtype),
        grid_spec=pltpu.PrefetchScalarGridSpec(
            num_scalar_prefetch=0,
            grid=(num_blocks,),
            in_specs=[
                pl.BlockSpec((10, tb), lambda i: (0, i)),            # streamed x tile
                pl.BlockSpec((5, 10), lambda i: (0, 0)),             # W1, VMEM-resident
                pl.BlockSpec((5, 1), lambda i: (0, 0)),              # b1, VMEM-resident
                pl.BlockSpec((5, 1), lambda i: (0, 0)),              # w2, VMEM-resident
                pl.BlockSpec(memory_space=pltpu.MemorySpace.SMEM),   # b2 scalar in SMEM
            ],
            out_specs=pl.BlockSpec((1, tb), lambda i: (0, i)),       # lane-dense output
        ),
        compiler_params=pltpu.CompilerParams(
            # Batch axis is embarrassingly parallel -> v7x dual-TC sharding; harmless on
            # single-TC v5e/v6e.
            dimension_semantics=("parallel",),
            # Allow the x.T producer to fuse into operand 0 (no extra HBM pass over x);
            # the small weight/bias operands stay un-fused.
            allow_input_fusion=[True, False, False, False, False],
            # Large tile needs > v5e's 16 MiB default scoped VMEM; 48 MiB fits physical
            # VMEM on every generation (v7x: 64 MiB).
            vmem_limit_bytes=48 * 1024 * 1024,
        ),
    )(x_t, w1, b1_col, w2_col, b2_s)

    # (1, B) -> (B, 1); trivial (4*B bytes) relayout.
    return out_t.reshape(B, 1)


if __name__ == "__main__":
    key = jax.random.PRNGKey(0)
    kx, kw1, kb1, kw2, kb2 = jax.random.split(key, 5)

    B = 1000  # not a multiple of 128 -> exercises the ragged (masked) last block path
    x = jax.random.normal(kx, (B, 10), dtype=jnp.float32)

    # Deterministic parameter init (shapes match nn.Linear(10,5) / nn.Linear(5,1)).
    w1 = jax.random.normal(kw1, (5, 10), dtype=jnp.float32) * 0.1
    b1 = jax.random.normal(kb1, (5,), dtype=jnp.float32) * 0.1
    w2 = jax.random.normal(kw2, (1, 5), dtype=jnp.float32) * 0.1
    b2 = jax.random.normal(kb2, (1,), dtype=jnp.float32) * 0.1

    out = simple_nn_forward(x, w1, b1, w2, b2)
    out = jax.block_until_ready(out)

    # Pure-JAX reference of the same semantics (PyTorch: relu(x@W1.T+b1)@W2.T+b2).
    ref = jnp.maximum(x @ w1.T + b1, 0.0) @ w2.T + b2
    assert out.shape == (B, 1)
    assert jnp.allclose(out, ref, atol=1e-5, rtol=1e-5)

    print("KERNEL_OK")
</pallas_src>

<mosaic_0001>
module attributes {stable_mosaic.version = 11 : i64} {
  func.func @mlp_kernel(%arg0: i32, %arg1: memref<10x1024xf32, #tpu.memory_space<vmem>>, %arg2: memref<5x10xf32, #tpu.memory_space<vmem>>, %arg3: memref<5x1xf32, #tpu.memory_space<vmem>>, %arg4: memref<5x1xf32, #tpu.memory_space<vmem>>, %arg5: memref<1xf32, #tpu.memory_space<smem>>, %arg6: memref<1x1024xf32, #tpu.memory_space<vmem>>) attributes {dimension_semantics = [#tpu.dimension_semantics<parallel>], iteration_bounds = array<i64: 1>, scalar_prefetch = 0 : i64, scratch_operands = 0 : i64, tpu.core_type = #tpu.core_type<tc>, window_params = [{transform_indices = @transform_0, window_bounds = array<i64: 10, 1024>}, {pipeline_mode = #tpu.pipeline_mode<synchronous>, transform_indices = @transform_1, window_bounds = array<i64: 5, 10>}, {pipeline_mode = #tpu.pipeline_mode<synchronous>, transform_indices = @transform_2, window_bounds = array<i64: 5, 1>}, {pipeline_mode = #tpu.pipeline_mode<synchronous>, transform_indices = @transform_3, window_bounds = array<i64: 5, 1>}, {transform_indices = @transform_4, window_bounds = array<i64: 1>}, {transform_indices = @transform_5, window_bounds = array<i64: 1, 1024>}]} {
    %c0 = arith.constant 0 : index
    %c0_0 = arith.constant 0 : index
    %0 = vector.load %arg2[%c0, %c0_0] : memref<5x10xf32, #tpu.memory_space<vmem>>, vector<5x10xf32>
    %c0_1 = arith.constant 0 : index
    %c0_2 = arith.constant 0 : index
    %1 = vector.load %arg1[%c0_1, %c0_2] : memref<10x1024xf32, #tpu.memory_space<vmem>>, vector<10x1024xf32>
    %cst = arith.constant dense<0.000000e+00> : vector<5x1024xf32>
    %2 = tpu.matmul %0, %1, %cst {dimension_numbers = #tpu.dot_dimension_numbers<[1], [0], [0], [1], [0, 0, 1, 1], [], []>} : vector<5x10xf32>, vector<10x1024xf32>, vector<5x1024xf32> -> vector<5x1024xf32>
    %c0_3 = arith.constant 0 : index
    %c0_4 = arith.constant 0 : index
    %3 = vector.load %arg3[%c0_3, %c0_4] : memref<5x1xf32, #tpu.memory_space<vmem>>, vector<5x1xf32>
    %4 = vector.broadcast %3 : vector<5x1xf32> to vector<5x1024xf32>
    %5 = arith.addf %2, %4 : vector<5x1024xf32>
    %cst_5 = arith.constant 0.000000e+00 : f32
    %6 = vector.broadcast %cst_5 : f32 to vector<5x1024xf32>
    %7 = arith.maximumf %5, %6 : vector<5x1024xf32>
    %c0_6 = arith.constant 0 : index
    %c0_7 = arith.constant 0 : index
    %8 = vector.load %arg4[%c0_6, %c0_7] : memref<5x1xf32, #tpu.memory_space<vmem>>, vector<5x1xf32>
    %9 = vector.broadcast %8 : vector<5x1xf32> to vector<5x1024xf32>
    %10 = arith.mulf %7, %9 : vector<5x1024xf32>
    %cst_8 = arith.constant dense<0.000000e+00> : vector<1024xf32>
    %11 = vector.multi_reduction <add>, %10, %cst_8 [0] : vector<5x1024xf32> to vector<1024xf32>
    %12 = vector.shape_cast %11 : vector<1024xf32> to vector<1x1024xf32>
    %c0_9 = arith.constant 0 : index
    %13 = memref.load %arg5[%c0_9] : memref<1xf32, #tpu.memory_space<smem>>
    %14 = vector.broadcast %13 : f32 to vector<1x1024xf32>
    %15 = arith.addf %12, %14 : vector<1x1024xf32>
    %c0_10 = arith.constant 0 : index
    %c0_11 = arith.constant 0 : index
    %16 = vector.load %arg6[%c0_10, %c0_11] : memref<1x1024xf32, #tpu.memory_space<vmem>>, vector<1x1024xf32>
    tpu.vector_store %arg6[%c0_10, %c0_11], %15 {strides = array<i32>} : memref<1x1024xf32, #tpu.memory_space<vmem>>, vector<1x1024xf32>,
    return
  }
  func.func @transform_0(%arg0: i32) -> (i32, i32) {
    %c0_i32 = arith.constant 0 : i32
    %c0_i32_0 = arith.constant 0 : i32
    return %c0_i32, %arg0 : i32, i32
  }
  func.func @transform_1(%arg0: i32) -> (i32, i32) {
    %c0_i32 = arith.constant 0 : i32
    %c0_i32_0 = arith.constant 0 : i32
    %c0_i32_1 = arith.constant 0 : i32
    return %c0_i32, %c0_i32_0 : i32, i32
  }
  func.func @transform_2(%arg0: i32) -> (i32, i32) {
    %c0_i32 = arith.constant 0 : i32
    %c0_i32_0 = arith.constant 0 : i32
    %c0_i32_1 = arith.constant 0 : i32
    return %c0_i32, %c0_i32_0 : i32, i32
  }
  func.func @transform_3(%arg0: i32) -> (i32, i32) {
    %c0_i32 = arith.constant 0 : i32
    %c0_i32_0 = arith.constant 0 : i32
    %c0_i32_1 = arith.constant 0 : i32
    return %c0_i32, %c0_i32_0 : i32, i32
  }
  func.func @transform_4(%arg0: i32) -> i32 {
    %c0_i32 = arith.constant 0 : i32
    %c0_i32_0 = arith.constant 0 : i32
    return %c0_i32 : i32
  }
  func.func @transform_5(%arg0: i32) -> (i32, i32) {
    %c0_i32 = arith.constant 0 : i32
    %c0_i32_0 = arith.constant 0 : i32
    return %c0_i32, %arg0 : i32, i32
  }
}

</mosaic_0001>

<llo_original>
// kernel: simple_nn_forward.2
$region0: #{simple_nn_forward.2}
  #allocation0 [shape = 'u32[]', space=smem, size = 0x4, offset = 0x4, fixed_abs, tag = 'smem constant byte address 0x4 - core index']
  #allocation1 [shape = 'u32[144,128]{1,0:T(1,128)}', space=vmem, size = 0x12000, scoped, tag = 'internal scratch']
  #allocation2 [shape = 'f32[1]{0:T(128)S(6)}', space=smem, size = 0x200, scoped, tag = 'scoped memory for simple_nn_forward.2']
  %s0 = inlined_call_operand.vmem [shape: f32[5,10], index: 0, kind: input, shape index: {}]
  %s1 = inlined_call_operand.vmem [shape: f32[5,1], index: 1, kind: input, shape index: {}]
  %s2 = inlined_call_operand.vmem [shape: f32[5,1], index: 2, kind: input, shape index: {}]
  %s3 = inlined_call_operand.<no memory space> [shape: f32[1], index: 3, kind: input, shape index: {}]
  %s4 = inlined_call_operand.vmem [shape: f32[1000,10], index: 4, kind: input, shape index: {}]
  %s5 = inlined_call_operand.hbm [shape: f32[1,1000], index: 5, kind: output, shape index: {}]
  %s6 = sld [smem:[#allocation0]]
  $region30: #{simple_nn_forward.2} parent=0
    _
  %s8 = ssub.s32 1, %s6
  %s9 = scalar_select 0, %s8, %s6
  %10 = sst [smem:[#allocation2]] %s3
  $region1: #{simple_nn_forward.2} parent=0
    #allocation3 [shape = 'u8[4096]{0}', space=vmem, size = 0x1000, scoped, tag = 'output window, operand 0, single buffered']
    #allocation4 [shape = 's32[1]{0}', space=sflag, size = 0x4, scoped, tag = 'scoped memory for simple_nn_forward.2']
    #allocation5 [shape = 'u8[65536]{0}', space=vmem, size = 0x10000, dematerialized = true, scoped, tag = 'FusionAdapter Buffer %fusion.1 = f32[10,1000]{1,0:T(8,128)} fusion(%param_4.1), kind=kLoop, calls=%fused_computation.1.clone, metadata={op_name="jit(simple_nn_forward)/transpose" stack_frame_id=7}']
    %11 = vsyncpa [#allocation4], 0
    // Predicated region
    $region2: #{simple_nn_forward.2} parent=1 // pred_check
      _
    $region3: #{simple_nn_forward.2} parent=1 // pred_check_branch
      %13 = sbr.rel (0) target = $region5
    $region4: #{simple_nn_forward.2} parent=1 // pred_region
      _
    $region5: #{simple_nn_forward.2} parent=1 // pred_fallthru
      _
    // Predicated region
    $region6: #{simple_nn_forward.2} parent=1 // pred_check
      _
    $region7: #{simple_nn_forward.2} parent=1 // pred_check_branch
      %15 = sbr.rel (0) target = $region9
    $region8: #{simple_nn_forward.2} parent=1 // pred_region
      _
    $region9: #{simple_nn_forward.2} parent=1 // pred_fallthru
      _
    // Predicated region
    $region10: #{simple_nn_forward.2} parent=1 // pred_check
      _
    $region11: #{simple_nn_forward.2} parent=1 // pred_check_branch
      %17 = sbr.rel (0) target = $region13
    $region12: #{simple_nn_forward.2} parent=1 // pred_region
      _
    $region13: #{simple_nn_forward.2} parent=1 // pred_fallthru
      _
    // Predicated region
    $region14: #{simple_nn_forward.2} parent=1 // pred_check
      _
    $region15: #{simple_nn_forward.2} parent=1 // pred_check_branch
      %19 = sbr.rel (0) target = $region17
    $region16: #{simple_nn_forward.2} parent=1 // pred_region
      _
    $region17: #{simple_nn_forward.2} parent=1 // pred_fallthru
      _
    // Predicated region
    $region18: #{simple_nn_forward.2} parent=1 // pred_check
      _
    $region19: #{simple_nn_forward.2} parent=1 // pred_check_branch
      %21 = sbr.rel (0) target = $region21
    $region20: #{simple_nn_forward.2} parent=1 // pred_region
      _
    $region21: #{simple_nn_forward.2} parent=1 // pred_fallthru
      _
    %v22 = vld [vmem:[%s4] sm:$0xff]
    %s24 = ssub.s32 256, 1
    %25 = vst [vmem:[#allocation5] sm:%s24] %v22
    %s26 = scalar_lea.vmem %s4, 8
    %v27 = vld [vmem:[%s26] sm:$0xff]
    %s28 = scalar_lea.vmem [#allocation5], 8
    %s30 = ssub.s32 256, 1
    %31 = vst [vmem:[%s28] sm:%s30] %v27
    %s32 = scalar_lea.vmem %s4, 16
    %v33 = vld [vmem:[%s32] sm:$0xff]
    %s34 = scalar_lea.vmem [#allocation5], 16
    %s36 = ssub.s32 256, 1
    %37 = vst [vmem:[%s34] sm:%s36] %v33
    %s38 = scalar_lea.vmem %s4, 24
    %v39 = vld [vmem:[%s38] sm:$0xff]
    %s40 = scalar_lea.vmem [#allocation5], 24
    %s42 = ssub.s32 256, 1
    %43 = vst [vmem:[%s40] sm:%s42] %v39
    %s44 = scalar_lea.vmem %s4, 32
    %v45 = vld [vmem:[%s44] sm:$0xff]
    %s46 = scalar_lea.vmem [#allocation5], 32
    %s48 = ssub.s32 256, 1
    %49 = vst [vmem:[%s46] sm:%s48] %v45
    %s50 = scalar_lea.vmem %s4, 40
    %v51 = vld [vmem:[%s50] sm:$0xff]
    %s52 = scalar_lea.vmem [#allocation5], 40
    %s54 = ssub.s32 256, 1
    %55 = vst [vmem:[%s52] sm:%s54] %v51
    %s56 = scalar_lea.vmem %s4, 48
    %v57 = vld [vmem:[%s56] sm:$0xff]
    %s58 = scalar_lea.vmem [#allocation5], 48
    %s60 = ssub.s32 256, 1
    %61 = vst [vmem:[%s58] sm:%s60] %v57
    %s62 = scalar_lea.vmem %s4, 56
    %v63 = vld [vmem:[%s62] sm:$0xff]
    %s64 = scalar_lea.vmem [#allocation5], 56
    %s66 = ssub.s32 256, 1
    %67 = vst [vmem:[%s64] sm:%s66] %v63
    %s68 = scalar_lea.vmem %s4, 64
    %v69 = vld [vmem:[%s68] sm:$0xff]
    %s70 = scalar_lea.vmem [#allocation5], 64
    %s72 = ssub.s32 256, 1
    %73 = vst [vmem:[%s70] sm:%s72] %v69
    %s74 = scalar_lea.vmem %s4, 72
    %v75 = vld [vmem:[%s74] sm:$0xff]
    %s76 = scalar_lea.vmem [#allocation5], 72
    %s78 = ssub.s32 256, 1
    %79 = vst [vmem:[%s76] sm:%s78] %v75
    %s80 = scalar_lea.vmem %s4, 80
    %v81 = vld [vmem:[%s80] sm:$0xff]
    %s82 = scalar_lea.vmem [#allocation5], 80
    %s84 = ssub.s32 256, 1
    %85 = vst [vmem:[%s82] sm:%s84] %v81
    %s86 = scalar_lea.vmem %s4, 88
    %v87 = vld [vmem:[%s86] sm:$0xff]
    %s88 = scalar_lea.vmem [#allocation5], 88
    %s90 = ssub.s32 256, 1
    %91 = vst [vmem:[%s88] sm:%s90] %v87
    %s92 = scalar_lea.vmem %s4, 96
    %v93 = vld [vmem:[%s92] sm:$0xff]
    %s94 = scalar_lea.vmem [#allocation5], 96
    %s96 = ssub.s32 256, 1
    %97 = vst [vmem:[%s94] sm:%s96] %v93
    %s98 = scalar_lea.vmem %s4, 104
    %v99 = vld [vmem:[%s98] sm:$0xff]
    %s100 = scalar_lea.vmem [#allocation5], 104
    %s102 = ssub.s32 256, 1
    %103 = vst [vmem:[%s100] sm:%s102] %v99
    %s104 = scalar_lea.vmem %s4, 112
    %v105 = vld [vmem:[%s104] sm:$0xff]
    %s106 = scalar_lea.vmem [#allocation5], 112
    %s108 = ssub.s32 256, 1
    %109 = vst [vmem:[%s106] sm:%s108] %v105
    %s110 = scalar_lea.vmem %s4, 120
    %v111 = vld [vmem:[%s110] sm:$0xff]
    %s112 = scalar_lea.vmem [#allocation5], 120
    %s114 = ssub.s32 256, 1
    %115 = vst [vmem:[%s112] sm:%s114] %v111
    %v116 = vld [vmem:[%s0] sm:$0x1f]
    %v117 = vld [vmem:[#allocation5] sm:$0xff]
    %v118 = vld [vmem:[#allocation5 + $0x8] sm:$0xff]
    %v119 = vld [vmem:[#allocation5 + $0x10] sm:$0xff]
    %v120 = vld [vmem:[#allocation5 + $0x18] sm:$0xff]
    %v121 = vld [vmem:[#allocation5 + $0x20] sm:$0xff]
    %v122 = vld [vmem:[#allocation5 + $0x28] sm:$0xff]
    %v123 = vld [vmem:[#allocation5 + $0x30] sm:$0xff]
    %v124 = vld [vmem:[#allocation5 + $0x38] sm:$0xff]
    %v125 = vld [vmem:[#allocation5 + $0x40] sm:$0x3]
    %v126 = vld [vmem:[#allocation5 + $0x48] sm:$0x3]
    %v127 = vld [vmem:[#allocation5 + $0x50] sm:$0x3]
    %v128 = vld [vmem:[#allocation5 + $0x58] sm:$0x3]
    %v129 = vld [vmem:[#allocation5 + $0x60] sm:$0x3]
    %v130 = vld [vmem:[#allocation5 + $0x68] sm:$0x3]
    %v131 = vld [vmem:[#allocation5 + $0x70] sm:$0x3]
    %v132 = vld [vmem:[#allocation5 + $0x78] sm:$0x3]
    %v133 = vld [vmem:[%s1] sm:$0x1f]
    %135 = vset.pattern.permute.xlu0 0
    %136 = vperm.xlu0 %135, %v133
    %v137 = vpop.permute.xlu0 %136
    %vm139 = vcmask 80896
    %v141 = vsel %vm139, %v116, 0
    %vm143 = vcmask 1041408
    %v145 = vsel %vm143, %v125, 0
    %v148 = vsel %vm143, %v126, 0
    %v151 = vsel %vm143, %v127, 0
    %v154 = vsel %vm143, %v128, 0
    %v157 = vsel %vm143, %v129, 0
    %v160 = vsel %vm143, %v130, 0
    %v163 = vsel %vm143, %v131, 0
    %v166 = vsel %vm143, %v132, 0
    %168 = vmatprep.subr.mxu0 0.0
    %169 = vmatpush1.msra.mxu0 0.0
    %170 = vmatprep.subr.mxu0 0.0
    %171 = vmatpush1.msra.mxu0 0.0
    %172 = vmatprep.subr.mxu0 0.0
    %173 = vmatpush1.msra.mxu0 0.0
    %174 = vmatprep.subr.mxu0 0.0
    %175 = vmatpush1.msra.mxu0 0.0
    %176 = vmatprep.subr.mxu0 0.0
    %177 = vmatpush1.msra.mxu0 0.0
    %178 = vmatprep.subr.mxu0 0.0
    %179 = vmatpush1.msra.mxu0 0.0
    %180 = vmatprep.subr.mxu0 0.0
    %181 = vmatpush1.msra.mxu0 0.0
    %182 = vmatprep.subr.mxu0 0.0
    %183 = vmatpush1.msra.mxu0 0.0
    %184 = vmatprep.subr.mxu0 0.0
    %185 = vmatpush1.msra.mxu0 0.0
    %186 = vmatprep.subr.mxu0 0.0
    %187 = vmatpush1.msra.mxu0 0.0
    %188 = vmatprep.subr.mxu0 0.0
    %189 = vmatpush1.msra.mxu0 0.0
    %190 = vmatprep.subr.mxu0 0.0
    %191 = vmatpush1.msra.mxu0 0.0
    %192 = vmatprep.subr.mxu0 0.0
    %193 = vmatpush1.msra.mxu0 0.0
    %194 = vmatprep.subr.mxu0 0.0
    %195 = vmatpush1.msra.mxu0 0.0
    %196 = vmatprep.subr.mxu0 %v148
    %197 = vmatpush1.msra.mxu0 %v145
    %198 = vmatprep.subr.mxu0 %v118
    %199 = vmatpush1.msra.mxu0 %v117
    %200 = vmatprep.subr.mxu0 0.0
    %201 = vmatpush2.msra.mxu0 0.0
    %202 = vmatprep.subr.mxu0 0.0
    %203 = vmatpush2.msra.mxu0 0.0
    %204 = vmatprep.subr.mxu0 0.0
    %205 = vmatpush2.msra.mxu0 0.0
    %206 = vmatprep.subr.mxu0 0.0
    %207 = vmatpush2.msra.mxu0 0.0
    %208 = vmatprep.subr.mxu0 0.0
    %209 = vmatpush2.msra.mxu0 0.0
    %210 = vmatprep.subr.mxu0 0.0
    %211 = vmatpush2.msra.mxu0 0.0
    %212 = vmatprep.subr.mxu0 0.0
    %213 = vmatpush2.msra.mxu0 0.0
    %214 = vmatprep.subr.mxu0 0.0
    %215 = vmatpush2.msra.mxu0 0.0
    %216 = vmatprep.subr.mxu0 0.0
    %217 = vmatpush2.msra.mxu0 0.0
    %218 = vmatprep.subr.mxu0 0.0
    %219 = vmatpush2.msra.mxu0 0.0
    %220 = vmatprep.subr.mxu0 0.0
    %221 = vmatpush2.msra.mxu0 0.0
    %222 = vmatprep.subr.mxu0 0.0
    %223 = vmatpush2.msra.mxu0 0.0
    %224 = vmatprep.subr.mxu0 0.0
    %225 = vmatpush2.msra.mxu0 0.0
    %226 = vmatprep.subr.mxu0 0.0
    %227 = vmatpush2.msra.mxu0 0.0
    %228 = vmatprep.subr.mxu0 0.0
    %229 = vmatpush2.msra.mxu0 0.0
    %230 = vmatprep.subr.mxu0 0.0
    %231 = vmatpush2.msra.mxu0 0.0
    %232 = vmatprep.mubr.f32.mxu0 0.0
    %233 = vmatmul.mubr.f32.gmra.mxu0 %v141
    %v234 = vpop.f32.mrf.mxu0
    %v235 = vadd.f32 %v137, %v234
    %v236 = vpop.f32.mrf.mxu0
    %v237 = vadd.f32 %v137, %v236
    %238 = vdwg.mxu0
    %239 = vmatprep.subr.mxu0 0.0
    %240 = vmatpush1.msra.mxu0 0.0
    %241 = vmatprep.subr.mxu0 0.0
    %242 = vmatpush1.msra.mxu0 0.0
    %243 = vmatprep.subr.mxu0 0.0
    %244 = vmatpush1.msra.mxu0 0.0
    %245 = vmatprep.subr.mxu0 0.0
    %246 = vmatpush1.msra.mxu0 0.0
    %247 = vmatprep.subr.mxu0 0.0
    %248 = vmatpush1.msra.mxu0 0.0
    %249 = vmatprep.subr.mxu0 0.0
    %250 = vmatpush1.msra.mxu0 0.0
    %251 = vmatprep.subr.mxu0 0.0
    %252 = vmatpush1.msra.mxu0 0.0
    %253 = vmatprep.subr.mxu0 0.0
    %254 = vmatpush1.msra.mxu0 0.0
    %255 = vmatprep.subr.mxu0 0.0
    %256 = vmatpush1.msra.mxu0 0.0
    %257 = vmatprep.subr.mxu0 0.0
    %258 = vmatpush1.msra.mxu0 0.0
    %259 = vmatprep.subr.mxu0 0.0
    %260 = vmatpush1.msra.mxu0 0.0
    %261 = vmatprep.subr.mxu0 0.0
    %262 = vmatpush1.msra.mxu0 0.0
    %263 = vmatprep.subr.mxu0 0.0
    %264 = vmatpush1.msra.mxu0 0.0
    %265 = vmatprep.subr.mxu0 0.0
    %266 = vmatpush1.msra.mxu0 0.0
    %267 = vmatprep.subr.mxu0 %v154
    %268 = vmatpush1.msra.mxu0 %v151
    %269 = vmatprep.subr.mxu0 %v120
    %270 = vmatpush1.msra.mxu0 %v119
    %271 = vmatprep.subr.mxu0 0.0
    %272 = vmatpush2.msra.mxu0 0.0
    %273 = vmatprep.subr.mxu0 0.0
    %274 = vmatpush2.msra.mxu0 0.0
    %275 = vmatprep.subr.mxu0 0.0
    %276 = vmatpush2.msra.mxu0 0.0
    %277 = vmatprep.subr.mxu0 0.0
    %278 = vmatpush2.msra.mxu0 0.0
    %279 = vmatprep.subr.mxu0 0.0
    %280 = vmatpush2.msra.mxu0 0.0
    %281 = vmatprep.subr.mxu0 0.0
    %282 = vmatpush2.msra.mxu0 0.0
    %283 = vmatprep.subr.mxu0 0.0
    %284 = vmatpush2.msra.mxu0 0.0
    %285 = vmatprep.subr.mxu0 0.0
    %286 = vmatpush2.msra.mxu0 0.0
    %287 = vmatprep.subr.mxu0 0.0
    %288 = vmatpush2.msra.mxu0 0.0
    %289 = vmatprep.subr.mxu0 0.0
    %290 = vmatpush2.msra.mxu0 0.0
    %291 = vmatprep.subr.mxu0 0.0
    %292 = vmatpush2.msra.mxu0 0.0
    %293 = vmatprep.subr.mxu0 0.0
    %294 = vmatpush2.msra.mxu0 0.0
    %295 = vmatprep.subr.mxu0 0.0
    %296 = vmatpush2.msra.mxu0 0.0
    %297 = vmatprep.subr.mxu0 0.0
    %298 = vmatpush2.msra.mxu0 0.0
    %299 = vmatprep.subr.mxu0 0.0
    %300 = vmatpush2.msra.mxu0 0.0
    %301 = vmatprep.subr.mxu0 0.0
    %302 = vmatpush2.msra.mxu0 0.0
    %303 = vmatprep.mubr.f32.mxu0 0.0
    %304 = vmatmul.mubr.f32.gmra.mxu0 %v141
    %v305 = vpop.f32.mrf.mxu0
    %v306 = vadd.f32 %v137, %v305
    %v307 = vpop.f32.mrf.mxu0
    %v308 = vadd.f32 %v137, %v307
    %309 = vdwg.mxu0
    %310 = vmatprep.subr.mxu0 0.0
    %311 = vmatpush1.msra.mxu0 0.0
    %312 = vmatprep.subr.mxu0 0.0
    %313 = vmatpush1.msra.mxu0 0.0
    %314 = vmatprep.subr.mxu0 0.0
    %315 = vmatpush1.msra.mxu0 0.0
    %316 = vmatprep.subr.mxu0 0.0
    %317 = vmatpush1.msra.mxu0 0.0
    %318 = vmatprep.subr.mxu0 0.0
    %319 = vmatpush1.msra.mxu0 0.0
    %320 = vmatprep.subr.mxu0 0.0
    %321 = vmatpush1.msra.mxu0 0.0
    %322 = vmatprep.subr.mxu0 0.0
    %323 = vmatpush1.msra.mxu0 0.0
    %324 = vmatprep.subr.mxu0 0.0
    %325 = vmatpush1.msra.mxu0 0.0
    %326 = vmatprep.subr.mxu0 0.0
    %327 = vmatpush1.msra.mxu0 0.0
    %328 = vmatprep.subr.mxu0 0.0
    %329 = vmatpush1.msra.mxu0 0.0
    %330 = vmatprep.subr.mxu0 0.0
    %331 = vmatpush1.msra.mxu0 0.0
    %332 = vmatprep.subr.mxu0 0.0
    %333 = vmatpush1.msra.mxu0 0.0
    %334 = vmatprep.subr.mxu0 0.0
    %335 = vmatpush1.msra.mxu0 0.0
    %336 = vmatprep.subr.mxu0 0.0
    %337 = vmatpush1.msra.mxu0 0.0
    %338 = vmatprep.subr.mxu0 %v160
    %339 = vmatpush1.msra.mxu0 %v157
    %340 = vmatprep.subr.mxu0 %v122
    %341 = vmatpush1.msra.mxu0 %v121
    %342 = vmatprep.subr.mxu0 0.0
    %343 = vmatpush2.msra.mxu0 0.0
    %344 = vmatprep.subr.mxu0 0.0
    %345 = vmatpush2.msra.mxu0 0.0
    %346 = vmatprep.subr.mxu0 0.0
    %347 = vmatpush2.msra.mxu0 0.0
    %348 = vmatprep.subr.mxu0 0.0
    %349 = vmatpush2.msra.mxu0 0.0
    %350 = vmatprep.subr.mxu0 0.0
    %351 = vmatpush2.msra.mxu0 0.0
    %352 = vmatprep.subr.mxu0 0.0
    %353 = vmatpush2.msra.mxu0 0.0
    %354 = vmatprep.subr.mxu0 0.0
    %355 = vmatpush2.msra.mxu0 0.0
    %356 = vmatprep.subr.mxu0 0.0
    %357 = vmatpush2.msra.mxu0 0.0
    %358 = vmatprep.subr.mxu0 0.0
    %359 = vmatpush2.msra.mxu0 0.0
    %360 = vmatprep.subr.mxu0 0.0
    %361 = vmatpush2.msra.mxu0 0.0
    %362 = vmatprep.subr.mxu0 0.0
    %363 = vmatpush2.msra.mxu0 0.0
    %364 = vmatprep.subr.mxu0 0.0
    %365 = vmatpush2.msra.mxu0 0.0
    %366 = vmatprep.subr.mxu0 0.0
    %367 = vmatpush2.msra.mxu0 0.0
    %368 = vmatprep.subr.mxu0 0.0
    %369 = vmatpush2.msra.mxu0 0.0
    %370 = vmatprep.subr.mxu0 0.0
    %371 = vmatpush2.msra.mxu0 0.0
    %372 = vmatprep.subr.mxu0 0.0
    %373 = vmatpush2.msra.mxu0 0.0
    %374 = vmatprep.mubr.f32.mxu0 0.0
    %375 = vmatmul.mubr.f32.gmra.mxu0 %v141
    %v376 = vpop.f32.mrf.mxu0
    %v377 = vadd.f32 %v137, %v376
    %v378 = vpop.f32.mrf.mxu0
    %v379 = vadd.f32 %v137, %v378
    %380 = vdwg.mxu0
    %381 = vmatprep.subr.mxu0 0.0
    %382 = vmatpush1.msra.mxu0 0.0
    %383 = vmatprep.subr.mxu0 0.0
    %384 = vmatpush1.msra.mxu0 0.0
    %385 = vmatprep.subr.mxu0 0.0
    %386 = vmatpush1.msra.mxu0 0.0
    %387 = vmatprep.subr.mxu0 0.0
    %388 = vmatpush1.msra.mxu0 0.0
    %389 = vmatprep.subr.mxu0 0.0
    %390 = vmatpush1.msra.mxu0 0.0
    %391 = vmatprep.subr.mxu0 0.0
    %392 = vmatpush1.msra.mxu0 0.0
    %393 = vmatprep.subr.mxu0 0.0
    %394 = vmatpush1.msra.mxu0 0.0
    %395 = vmatprep.subr.mxu0 0.0
    %396 = vmatpush1.msra.mxu0 0.0
    %397 = vmatprep.subr.mxu0 0.0
    %398 = vmatpush1.msra.mxu0 0.0
    %399 = vmatprep.subr.mxu0 0.0
    %400 = vmatpush1.msra.mxu0 0.0
    %401 = vmatprep.subr.mxu0 0.0
    %402 = vmatpush1.msra.mxu0 0.0
    %403 = vmatprep.subr.mxu0 0.0
    %404 = vmatpush1.msra.mxu0 0.0
    %405 = vmatprep.subr.mxu0 0.0
    %406 = vmatpush1.msra.mxu0 0.0
    %407 = vmatprep.subr.mxu0 0.0
    %408 = vmatpush1.msra.mxu0 0.0
    %409 = vmatprep.subr.mxu0 %v166
    %410 = vmatpush1.msra.mxu0 %v163
    %411 = vmatprep.subr.mxu0 %v124
    %412 = vmatpush1.msra.mxu0 %v123
    %413 = vmatprep.subr.mxu0 0.0
    %414 = vmatpush2.msra.mxu0 0.0
    %415 = vmatprep.subr.mxu0 0.0
    %416 = vmatpush2.msra.mxu0 0.0
    %417 = vmatprep.subr.mxu0 0.0
    %418 = vmatpush2.msra.mxu0 0.0
    %419 = vmatprep.subr.mxu0 0.0
    %420 = vmatpush2.msra.mxu0 0.0
    %421 = vmatprep.subr.mxu0 0.0
    %422 = vmatpush2.msra.mxu0 0.0
    %423 = vmatprep.subr.mxu0 0.0
    %424 = vmatpush2.msra.mxu0 0.0
    %425 = vmatprep.subr.mxu0 0.0
    %426 = vmatpush2.msra.mxu0 0.0
    %427 = vmatprep.subr.mxu0 0.0
    %428 = vmatpush2.msra.mxu0 0.0
    %429 = vmatprep.subr.mxu0 0.0
    %430 = vmatpush2.msra.mxu0 0.0
    %431 = vmatprep.subr.mxu0 0.0
    %432 = vmatpush2.msra.mxu0 0.0
    %433 = vmatprep.subr.mxu0 0.0
    %434 = vmatpush2.msra.mxu0 0.0
    %435 = vmatprep.subr.mxu0 0.0
    %436 = vmatpush2.msra.mxu0 0.0
    %437 = vmatprep.subr.mxu0 0.0
    %438 = vmatpush2.msra.mxu0 0.0
    %439 = vmatprep.subr.mxu0 0.0
    %440 = vmatpush2.msra.mxu0 0.0
    %441 = vmatprep.subr.mxu0 0.0
    %442 = vmatpush2.msra.mxu0 0.0
    %443 = vmatprep.subr.mxu0 0.0
    %444 = vmatpush2.msra.mxu0 0.0
    %445 = vmatprep.mubr.f32.mxu0 0.0
    %446 = vmatmul.mubr.f32.gmra.mxu0 %v141
    %v447 = vpop.f32.mrf.mxu0
    %v448 = vadd.f32 %v137, %v447
    %v449 = vpop.f32.mrf.mxu0
    %v450 = vadd.f32 %v137, %v449
    %451 = vdwg.mxu0
    %v452 = vmax.f32 %v235, 0.0
    %v453 = vmax.f32 %v237, 0.0
    %v454 = vmax.f32 %v306, 0.0
    %v455 = vmax.f32 %v308, 0.0
    %v456 = vmax.f32 %v377, 0.0
    %v457 = vmax.f32 %v379, 0.0
    %v458 = vmax.f32 %v448, 0.0
    %v459 = vmax.f32 %v450, 0.0
    %v460 = vld [vmem:[%s2] sm:$0x1f]
    %462 = vset.pattern.permute.xlu0 0
    %463 = vperm.xlu0 %462, %v460
    %v464 = vpop.permute.xlu0 %463
    %v466 = vmul.f32 %v452, %v464
    %v467 = vmul.f32 %v453, %v464
    %v468 = vmul.f32 %v454, %v464
    %v469 = vmul.f32 %v455, %v464
    %v470 = vmul.f32 %v456, %v464
    %v471 = vmul.f32 %v457, %v464
    %v472 = vmul.f32 %v458, %v464
    %v473 = vmul.f32 %v459, %v464
    %vm474 = vcmask 1044480
    %v475 = vsel %vm474, %v466, 0.0
    %v476 = vrot.slane %v475, 4
    %v477 = vadd.f32 %v475, %v476
    %v478 = vrot.slane %v477, 2
    %v479 = vadd.f32 %v477, %v478
    %v480 = vrot.slane %v479, 1
    %v481 = vadd.f32 %v479, %v480
    %v482 = vsel %vm474, %v467, 0.0
    %v483 = vrot.slane %v482, 4
    %v484 = vadd.f32 %v482, %v483
    %v485 = vrot.slane %v484, 2
    %v486 = vadd.f32 %v484, %v485
    %v487 = vrot.slane %v486, 1
    %v488 = vadd.f32 %v486, %v487
    %v489 = vsel %vm474, %v468, 0.0
    %v490 = vrot.slane %v489, 4
    %v491 = vadd.f32 %v489, %v490
    %v492 = vrot.slane %v491, 2
    %v493 = vadd.f32 %v491, %v492
    %v494 = vrot.slane %v493, 1
    %v495 = vadd.f32 %v493, %v494
    %v496 = vsel %vm474, %v469, 0.0
    %v497 = vrot.slane %v496, 4
    %v498 = vadd.f32 %v496, %v497
    %v499 = vrot.slane %v498, 2
    %v500 = vadd.f32 %v498, %v499
    %v501 = vrot.slane %v500, 1
    %v502 = vadd.f32 %v500, %v501
    %v503 = vsel %vm474, %v470, 0.0
    %v504 = vrot.slane %v503, 4
    %v505 = vadd.f32 %v503, %v504
    %v506 = vrot.slane %v505, 2
    %v507 = vadd.f32 %v505, %v506
    %v508 = vrot.slane %v507, 1
    %v509 = vadd.f32 %v507, %v508
    %v510 = vsel %vm474, %v471, 0.0
    %v511 = vrot.slane %v510, 4
    %v512 = vadd.f32 %v510, %v511
    %v513 = vrot.slane %v512, 2
    %v514 = vadd.f32 %v512, %v513
    %v515 = vrot.slane %v514, 1
    %v516 = vadd.f32 %v514, %v515
    %v517 = vsel %vm474, %v472, 0.0
    %v518 = vrot.slane %v517, 4
    %v519 = vadd.f32 %v517, %v518
    %v520 = vrot.slane %v519, 2
    %v521 = vadd.f32 %v519, %v520
    %v522 = vrot.slane %v521, 1
    %v523 = vadd.f32 %v521, %v522
    %v524 = vsel %vm474, %v473, 0.0
    %v525 = vrot.slane %v524, 4
    %v526 = vadd.f32 %v524, %v525
    %v527 = vrot.slane %v526, 2
    %v528 = vadd.f32 %v526, %v527
    %v529 = vrot.slane %v528, 1
    %v530 = vadd.f32 %v528, %v529
    %s531 = sld [smem:[#allocation2]]
    %v532 = vstv %s531
    %v533 = vadd.f32 %v481, %v532
    %v534 = vadd.f32 %v488, %v532
    %v535 = vadd.f32 %v495, %v532
    %v536 = vadd.f32 %v502, %v532
    %v537 = vadd.f32 %v509, %v532
    %v538 = vadd.f32 %v516, %v532
    %v539 = vadd.f32 %v523, %v532
    %v540 = vadd.f32 %v530, %v532
    %v549 = vcombine.low %v533, %v534
    %v550 = vcombine.low %v535, %v536
    %v551 = vcombine.low %v537, %v538
    %v552 = vcombine.low %v539, %v540
    %v554 = vunpack.c.l.s4 1966171168
    %v555 = vunpack.c.0.s8 %v554
    %v556 = vlaneseq
    %v557 = vshrl.u32 %v556, 7
    %v558 = vsub.s32 %v555, %v557
    %v559 = vrot.slane %v549, %v558
    %v561 = vunpack.c.l.s4 1966171168
    %v562 = vunpack.c.0.s8 %v561
    %v563 = vlaneseq
    %v564 = vshrl.u32 %v563, 7
    %v565 = vsub.s32 %v562, %v564
    %v566 = vrot.slane %v550, %v565
    %v568 = vunpack.c.l.s4 1966171168
    %v569 = vunpack.c.0.s8 %v568
    %v570 = vlaneseq
    %v571 = vshrl.u32 %v570, 7
    %v572 = vsub.s32 %v569, %v571
    %v573 = vrot.slane %v551, %v572
    %v575 = vunpack.c.l.s4 1966171168
    %v576 = vunpack.c.0.s8 %v575
    %v577 = vlaneseq
    %v578 = vshrl.u32 %v577, 7
    %v579 = vsub.s32 %v576, %v578
    %v580 = vrot.slane %v552, %v579
    %v581 = vcombine.low %v559, %v566
    %v582 = vcombine.low %v573, %v580
    %v584 = vunpack.c.l.s4 1966171168
    %v585 = vunpack.c.0.s8 %v584
    %v586 = vlaneseq
    %v587 = vshrl.u32 %v586, 7
    %v588 = vsub.s32 %v585, %v587
    %v589 = vrot.slane %v581, %v588
    %v591 = vunpack.c.l.s4 1966171168
    %v592 = vunpack.c.0.s8 %v591
    %v593 = vlaneseq
    %v594 = vshrl.u32 %v593, 7
    %v595 = vsub.s32 %v592, %v594
    %v596 = vrot.slane %v582, %v595
    %v597 = vcombine.low %v589, %v596
    %599 = vst [vmem:[#allocation3] sm:$0xff] %v597
    // Predicated region
    $region22: #{simple_nn_forward.2} parent=1 // pred_check
      _
    $region23: #{simple_nn_forward.2} parent=1 // pred_check_branch
      %601 = sbr.rel (0) target = $region25
    $region24: #{simple_nn_forward.2} parent=1 // pred_region
      %s603 = ssub.s32 128, 128
      %604 = vsyncadd [#allocation4], %s603
      %s606 = sshll.u32 [#allocation3], 4
      %s607 = int_to_ptr.vmem [resolvable:$true] %s606
      %609 = dma.vmem_to_hbm [thread:$0]  %s607, 128, %s5, [#allocation4]
    $region25: #{simple_nn_forward.2} parent=1 // pred_fallthru
      _
    // Predicated region
    $region26: #{simple_nn_forward.2} parent=1 // pred_check
      _
    $region27: #{simple_nn_forward.2} parent=1 // pred_check_branch
      %611 = sbr.rel (0) target = $region29
    $region28: #{simple_nn_forward.2} parent=1 // pred_region
      %612 = dma.done [#allocation4], 128
    $region29: #{simple_nn_forward.2} parent=1 // pred_fallthru
      _
    %613 = vsyncpa [#allocation4], 1

</llo_original>
